<compile_context>
chip_gen: v7x
topology: tpu7x:2x2x1
jax: 0.10.0
libtpu: 0.0.40
codegen_flags: <defaults>
</compile_context>

<pallas_src>
import functools

import jax
import jax.numpy as jnp
from jax.experimental import pallas as pl
from jax.experimental.pallas import tpu as pltpu


def _round_up(n, m):
    return ((n + m - 1) // m) * m


def _bestrq_kernel(x_ref, w_ref, mask_ref, ind_ref, best_s_ref, best_i_ref,
                   *, k_total, needs_k_mask):
    # x_ref    : (TILE_N, C)       streamed input tile (caller dtype)
    # w_ref    : (C, TILE_K) bf16  folded weight W = projection @ codes_norm.T
    # mask_ref : (TILE_N, 1) i32   mask tile
    # ind_ref  : (TILE_N, 1) i32   output indices (written at last K step)
    # best_s_ref / best_i_ref : running max score / argmax over the K axis
    j = pl.program_id(1)

    @pl.when(j == 0)
    def _():
        best_s_ref[...] = jnp.full_like(best_s_ref, -jnp.inf)
        best_i_ref[...] = jnp.zeros_like(best_i_ref)

    # Single small MXU matmul (bf16 inputs, f32 accumulation).
    x = x_ref[...].astype(w_ref.dtype)
    xc = jnp.dot(x, w_ref[...], preferred_element_type=jnp.float32)  # (TILE_N, TILE_K)

    tn, tk = xc.shape
    col = jax.lax.broadcasted_iota(jnp.int32, (tn, tk), 1) + j * tk
    if needs_k_mask:
        # Zero-padded codebook columns beyond K must never win the argmax.
        xc = jnp.where(col < k_total, xc, -jnp.inf)

    # First-argmax within this K block (ties -> smallest column index,
    # matching torch.argmin's first-minimum tie-break on the distance).
    loc_max = jnp.max(xc, axis=-1, keepdims=True)                    # (TILE_N, 1)
    big = jnp.iinfo(jnp.int32).max
    loc_idx = jnp.min(jnp.where(xc == loc_max, col, big),
                      axis=-1, keepdims=True)                        # (TILE_N, 1)

    # Merge with the running best; strict '>' keeps the first global argmax.
    better = loc_max > best_s_ref[...]
    best_i_ref[...] = jnp.where(better, loc_idx, best_i_ref[...])
    best_s_ref[...] = jnp.where(better, loc_max, best_s_ref[...])

    @pl.when(j == pl.num_programs(1) - 1)
    def _():
        # apply_mask(): zero out masked positions.
        # TODO(synk): assumes TensorMask.apply_mask() zero-fills masked entries.
        ind_ref[...] = best_i_ref[...] * mask_ref[...]


@functools.partial(jax.jit, static_argnames=("compute_dtype",))
def bestrq_forward(x, mask, projection, codebooks, *, compute_dtype=jnp.bfloat16):
    """x: (B,T,C) float, mask: (B,T) in {0,1}, projection: (C,C), codebooks: (K,C)."""
    B, T, C = x.shape
    K = codebooks.shape[0]
    N = B * T

    # ---- fold projection + codebook normalization into W (C, K); tiny op ----
    codes = codebooks.astype(jnp.float32)
    codes = codes / jnp.maximum(
        jnp.sqrt(jnp.sum(codes * codes, axis=-1, keepdims=True)), 1e-12)
    w = jnp.dot(projection.astype(jnp.float32), codes.T,
                precision=jax.lax.Precision.HIGHEST)                 # (C, K)

    # ---- row tiling: big tiles, but keep >= 2 steps for large N (v7x 2 TCs) --
    tile_n = min(1024, _round_up(N, 8))
    if N > 512 and pl.cdiv(N, tile_n) < 2:
        tile_n = _round_up(pl.cdiv(N, 2), 8)
    n_pad = _round_up(N, tile_n)
    g_n = n_pad // tile_n

    # ---- codebook tiling: block K so the score tile stays v7x-VMEM safe -----
    max_tile_k = 1024
    if K <= max_tile_k:
        tile_k, k_pad = K, K
    else:
        tile_k = max_tile_k
        k_pad = _round_up(K, tile_k)
    g_k = k_pad // tile_k

    # x streams unpadded along the feature dim; only rows padded to one tile.
    x2d = jnp.pad(x.reshape(N, C), ((0, n_pad - N), (0, 0)))
    w = jnp.pad(w, ((0, 0), (0, k_pad - K))).astype(compute_dtype)   # (C, k_pad)
    mask_col = jnp.pad(mask.reshape(N).astype(jnp.int32), (0, n_pad - N))[:, None]

    kernel = functools.partial(_bestrq_kernel, k_total=K,
                               needs_k_mask=(k_pad != K))

    ind = pl.pallas_call(
        kernel,
        out_shape=jax.ShapeDtypeStruct((n_pad, 1), jnp.int32),
        grid=(g_n, g_k),
        in_specs=[
            pl.BlockSpec((tile_n, C), lambda i, j: (i, 0)),   # x tile (resident over j)
            pl.BlockSpec((C, tile_k), lambda i, j: (0, j)),   # folded W block
            pl.BlockSpec((tile_n, 1), lambda i, j: (i, 0)),   # mask tile
        ],
        out_specs=pl.BlockSpec((tile_n, 1), lambda i, j: (i, 0)),
        scratch_shapes=[
            pltpu.VMEM((tile_n, 1), jnp.float32),             # running max score
            pltpu.VMEM((tile_n, 1), jnp.int32),               # running argmax
        ],
        compiler_params=pltpu.CompilerParams(
            # rows independent -> shard across TensorCores; K is a reduction.
            dimension_semantics=("parallel", "arbitrary"),
            vmem_limit_bytes=48 * 1024 * 1024,
        ),
    )(x2d, w, mask_col)

    indices = ind.reshape(n_pad)[:N].reshape(B, T)
    return {"indices": indices, "mask": mask}


if __name__ == "__main__":
    # Small shapes consistent with the module: b=2, t=8, dim=32, codebook_size=64.
    b, t, dim, codebook_size = 2, 8, 32, 64

    key = jax.random.PRNGKey(0)
    kx, kp, kc, km = jax.random.split(key, 4)
    x = jax.random.normal(kx, (b, t, dim), dtype=jnp.float32)
    # nn.init.xavier_normal_ on (dim, dim): std = sqrt(2 / (dim + dim)).
    projection = jax.random.normal(kp, (dim, dim), dtype=jnp.float32) * (2.0 / (2 * dim)) ** 0.5
    # torch.randn(codebook_size, dim)
    codebooks = jax.random.normal(kc, (codebook_size, dim), dtype=jnp.float32)
    # binary mask over (b, t)
    mask = (jax.random.uniform(km, (b, t)) > 0.2).astype(jnp.float32)

    out = bestrq_forward(x, mask, projection, codebooks)
    jax.block_until_ready(out)

    # Pure-JAX reference, faithful to the PyTorch forward (highest precision).
    hp = jax.lax.Precision.HIGHEST
    xp = jnp.einsum("btc,cd->btd", x, projection, precision=hp)
    xn = xp / jnp.maximum(jnp.linalg.norm(xp, axis=-1, keepdims=True), 1e-12)
    codes = codebooks / jnp.maximum(
        jnp.linalg.norm(codebooks, axis=-1, keepdims=True), 1e-12)
    x_pow = jnp.sum(xn * xn, axis=-1, keepdims=True)
    c_pow = jnp.sum(codes * codes, axis=-1)[None, None, :]
    xc = jnp.einsum("btc,kc->btk", xn, codes, precision=hp)
    dist = jnp.sqrt(jnp.maximum(x_pow + c_pow - 2.0 * xc, 0.0))

    ind_out = out["indices"]                                   # (b, t) i32, masked
    d_sel = jnp.take_along_axis(dist, ind_out[..., None], axis=-1)[..., 0]
    d_min = jnp.min(dist, axis=-1)
    valid = mask > 0.5
    # valid positions: chosen code must achieve the minimal distance
    # (tolerance covers f32/bf16 rounding on near-ties);
    # masked positions: index must be zero-filled.
    ok = jnp.where(valid, d_sel <= d_min + 1e-2, ind_out == 0)
    assert bool(jnp.all(ok)), "kernel indices do not match reference argmin"

    print("KERNEL_OK")
</pallas_src>

<mosaic_0001>
module attributes {stable_mosaic.version = 11 : i64} {
  func.func @_bestrq_kernel(%arg0: i32, %arg1: i32, %arg2: memref<16x32xf32, #tpu.memory_space<vmem>>, %arg3: memref<32x64xbf16, #tpu.memory_space<vmem>>, %arg4: memref<16x1xi32, #tpu.memory_space<vmem>>, %arg5: memref<16x1xi32, #tpu.memory_space<vmem>>, %arg6: memref<16x1xf32, #tpu.memory_space<vmem>>, %arg7: memref<16x1xi32, #tpu.memory_space<vmem>>) attributes {dimension_semantics = [#tpu.dimension_semantics<parallel>, #tpu.dimension_semantics<arbitrary>], iteration_bounds = array<i64: 1, 1>, scalar_prefetch = 0 : i64, scratch_operands = 2 : i64, tpu.core_type = #tpu.core_type<tc>, window_params = [{transform_indices = @transform_0, window_bounds = array<i64: 16, 32>}, {transform_indices = @transform_1, window_bounds = array<i64: 32, 64>}, {transform_indices = @transform_2, window_bounds = array<i64: 16, 1>}, {transform_indices = @transform_3, window_bounds = array<i64: 16, 1>}]} {
    %c0_i32 = arith.constant 0 : i32
    %0 = arith.cmpi eq, %arg1, %c0_i32 : i32
    %1 = arith.extui %0 : i1 to i32
    %c0_i32_0 = arith.constant 0 : i32
    %2 = arith.cmpi ne, %1, %c0_i32_0 : i32
    scf.if %2 {
      %cst_18 = arith.constant 0xFF800000 : f32
      %30 = vector.broadcast %cst_18 : f32 to vector<16x1xf32>
      %c0_19 = arith.constant 0 : index
      %c0_20 = arith.constant 0 : index
      %31 = vector.load %arg6[%c0_19, %c0_20] : memref<16x1xf32, #tpu.memory_space<vmem>>, vector<16x1xf32>
      tpu.vector_store %arg6[%c0_19, %c0_20], %30 {strides = array<i32>} : memref<16x1xf32, #tpu.memory_space<vmem>>, vector<16x1xf32>,
      %c0_i32_21 = arith.constant 0 : i32
      %32 = vector.broadcast %c0_i32_21 : i32 to vector<16x1xi32>
      %c0_22 = arith.constant 0 : index
      %c0_23 = arith.constant 0 : index
      %33 = vector.load %arg7[%c0_22, %c0_23] : memref<16x1xi32, #tpu.memory_space<vmem>>, vector<16x1xi32>
      tpu.vector_store %arg7[%c0_22, %c0_23], %32 {strides = array<i32>} : memref<16x1xi32, #tpu.memory_space<vmem>>, vector<16x1xi32>,
    } else {
    }
    %c0 = arith.constant 0 : index
    %c0_1 = arith.constant 0 : index
    %3 = vector.load %arg2[%c0, %c0_1] : memref<16x32xf32, #tpu.memory_space<vmem>>, vector<16x32xf32>
    %4 = arith.truncf %3 : vector<16x32xf32> to vector<16x32xbf16>
    %c0_2 = arith.constant 0 : index
    %c0_3 = arith.constant 0 : index
    %5 = vector.load %arg3[%c0_2, %c0_3] : memref<32x64xbf16, #tpu.memory_space<vmem>>, vector<32x64xbf16>
    %cst = arith.constant dense<0.000000e+00> : vector<16x64xf32>
    %6 = tpu.matmul %4, %5, %cst {dimension_numbers = #tpu.dot_dimension_numbers<[1], [0], [0], [1], [0, 0, 1, 1], [], []>} : vector<16x32xbf16>, vector<32x64xbf16>, vector<16x64xf32> -> vector<16x64xf32>
    %7 = tpu.iota {dimensions = array<i32: 1>} : vector<16x64xi32>
    %c64_i32 = arith.constant 64 : i32
    %8 = arith.muli %arg1, %c64_i32 : i32
    %9 = vector.broadcast %8 : i32 to vector<16x64xi32>
    %10 = arith.addi %7, %9 : vector<16x64xi32>
    %cst_4 = arith.constant dense<0xFF800000> : vector<16xf32>
    %11 = vector.multi_reduction <maximumf>, %6, %cst_4 [1] : vector<16x64xf32> to vector<16xf32>
    %12 = vector.shape_cast %11 : vector<16xf32> to vector<16x1xf32>
    %13 = vector.broadcast %12 : vector<16x1xf32> to vector<16x64xf32>
    %14 = arith.cmpf oeq, %6, %13 : vector<16x64xf32>
    %c2147483647_i32 = arith.constant 2147483647 : i32
    %15 = vector.broadcast %c2147483647_i32 : i32 to vector<16x64xi32>
    %16 = arith.select %14, %10, %15 : vector<16x64xi1>, vector<16x64xi32>
    %cst_5 = arith.constant dense<2147483647> : vector<16xi32>
    %17 = vector.multi_reduction <minsi>, %16, %cst_5 [1] : vector<16x64xi32> to vector<16xi32>
    %18 = vector.shape_cast %17 : vector<16xi32> to vector<16x1xi32>
    %c0_6 = arith.constant 0 : index
    %c0_7 = arith.constant 0 : index
    %19 = vector.load %arg6[%c0_6, %c0_7] : memref<16x1xf32, #tpu.memory_space<vmem>>, vector<16x1xf32>
    %20 = arith.cmpf ogt, %12, %19 : vector<16x1xf32>
    %c0_8 = arith.constant 0 : index
    %c0_9 = arith.constant 0 : index
    %21 = vector.load %arg7[%c0_8, %c0_9] : memref<16x1xi32, #tpu.memory_space<vmem>>, vector<16x1xi32>
    %22 = arith.select %20, %18, %21 : vector<16x1xi1>, vector<16x1xi32>
    %c0_10 = arith.constant 0 : index
    %c0_11 = arith.constant 0 : index
    %23 = vector.load %arg7[%c0_10, %c0_11] : memref<16x1xi32, #tpu.memory_space<vmem>>, vector<16x1xi32>
    tpu.vector_store %arg7[%c0_10, %c0_11], %22 {strides = array<i32>} : memref<16x1xi32, #tpu.memory_space<vmem>>, vector<16x1xi32>,
    %c0_12 = arith.constant 0 : index
    %c0_13 = arith.constant 0 : index
    %24 = vector.load %arg6[%c0_12, %c0_13] : memref<16x1xf32, #tpu.memory_space<vmem>>, vector<16x1xf32>
    %25 = arith.select %20, %12, %24 : vector<16x1xi1>, vector<16x1xf32>
    %c0_14 = arith.constant 0 : index
    %c0_15 = arith.constant 0 : index
    %26 = vector.load %arg6[%c0_14, %c0_15] : memref<16x1xf32, #tpu.memory_space<vmem>>, vector<16x1xf32>
    tpu.vector_store %arg6[%c0_14, %c0_15], %25 {strides = array<i32>} : memref<16x1xf32, #tpu.memory_space<vmem>>, vector<16x1xf32>,
    %c0_i32_16 = arith.constant 0 : i32
    %27 = arith.cmpi eq, %arg1, %c0_i32_16 : i32
    %28 = arith.extui %27 : i1 to i32
    %c0_i32_17 = arith.constant 0 : i32
    %29 = arith.cmpi ne, %28, %c0_i32_17 : i32
    scf.if %29 {
      %c0_18 = arith.constant 0 : index
      %c0_19 = arith.constant 0 : index
      %30 = vector.load %arg7[%c0_18, %c0_19] : memref<16x1xi32, #tpu.memory_space<vmem>>, vector<16x1xi32>
      %c0_20 = arith.constant 0 : index
      %c0_21 = arith.constant 0 : index
      %31 = vector.load %arg4[%c0_20, %c0_21] : memref<16x1xi32, #tpu.memory_space<vmem>>, vector<16x1xi32>
      %32 = arith.muli %30, %31 : vector<16x1xi32>
      %c0_22 = arith.constant 0 : index
      %c0_23 = arith.constant 0 : index
      %33 = vector.load %arg5[%c0_22, %c0_23] : memref<16x1xi32, #tpu.memory_space<vmem>>, vector<16x1xi32>
      tpu.vector_store %arg5[%c0_22, %c0_23], %32 {strides = array<i32>} : memref<16x1xi32, #tpu.memory_space<vmem>>, vector<16x1xi32>,
    } else {
    }
    return
  }
  func.func @transform_0(%arg0: i32, %arg1: i32) -> (i32, i32) {
    %c0_i32 = arith.constant 0 : i32
    %c0_i32_0 = arith.constant 0 : i32
    return %arg0, %c0_i32 : i32, i32
  }
  func.func @transform_1(%arg0: i32, %arg1: i32) -> (i32, i32) {
    %c0_i32 = arith.constant 0 : i32
    %c0_i32_0 = arith.constant 0 : i32
    return %c0_i32, %arg1 : i32, i32
  }
  func.func @transform_2(%arg0: i32, %arg1: i32) -> (i32, i32) {
    %c0_i32 = arith.constant 0 : i32
    %c0_i32_0 = arith.constant 0 : i32
    return %arg0, %c0_i32 : i32, i32
  }
  func.func @transform_3(%arg0: i32, %arg1: i32) -> (i32, i32) {
    %c0_i32 = arith.constant 0 : i32
    %c0_i32_0 = arith.constant 0 : i32
    return %arg0, %c0_i32 : i32, i32
  }
}

</mosaic_0001>

<llo_original>
// kernel: bestrq_forward.1
$region0: #{bestrq_forward.1}
  #allocation0 [shape = 'u32[]', space=smem, size = 0x4, offset = 0x4, fixed_abs, tag = 'smem constant byte address 0x4 - core index']
  #allocation1 [shape = 'u32[144,128]{1,0:T(1,128)}', space=vmem, size = 0x12000, scoped, tag = 'internal scratch']
  #allocation2 [shape = 'f32[16,1]{1,0:T(8,128)}', space=vmem, size = 0x2000, scoped, tag = 'scratch operand']
  #allocation3 [shape = 's32[16,1]{1,0:T(8,128)}', space=vmem, size = 0x2000, scoped, tag = 'scratch operand']
  %s0 = inlined_call_operand.vmem [shape: f32[16,32], index: 0, kind: input, shape index: {}]
  %s1 = inlined_call_operand.vmem [shape: bf16[32,64], index: 1, kind: input, shape index: {}]
  %s2 = inlined_call_operand.vmem [shape: s32[16,1], index: 2, kind: input, shape index: {}]
  %s3 = inlined_call_operand.vmem [shape: s32[16,1], index: 3, kind: output, shape index: {}]
  %s4 = sld [smem:[#allocation0]]
  $region30: #{bestrq_forward.1} parent=0
    _
  %s6 = ssub.s32 1, %s4
  %s7 = scalar_select 0, %s6, %s4
  // Predicated region
  $region2: #{bestrq_forward.1} parent=0 // pred_check
    _
  $region3: #{bestrq_forward.1} parent=0 // pred_check_branch
    %9 = sbr.rel (0) target = $region5
  $region4: #{bestrq_forward.1} parent=0 // pred_region
    _
  $region5: #{bestrq_forward.1} parent=0 // pred_fallthru
    _
  // Predicated region
  $region6: #{bestrq_forward.1} parent=0 // pred_check
    _
  $region7: #{bestrq_forward.1} parent=0 // pred_check_branch
    %11 = sbr.rel (0) target = $region9
  $region8: #{bestrq_forward.1} parent=0 // pred_region
    _
  $region9: #{bestrq_forward.1} parent=0 // pred_fallthru
    _
  // Predicated region
  $region10: #{bestrq_forward.1} parent=0 // pred_check
    _
  $region11: #{bestrq_forward.1} parent=0 // pred_check_branch
    %13 = sbr.rel (0) target = $region13
  $region12: #{bestrq_forward.1} parent=0 // pred_region
    _
  $region13: #{bestrq_forward.1} parent=0 // pred_fallthru
    _
  %p15 = scmp.eq.s32.totalorder 0, 0
  // Predicated region
  $region14: #{bestrq_forward.1} parent=0 // pred_check
    %p16 = pneg %p15
  $region15: #{bestrq_forward.1} parent=0 // pred_check_branch
    %18 = sbr.rel (%p16) target = $region17
  $region16: #{bestrq_forward.1} parent=0 // pred_region
    %vm19 = vcmask 7168
    %20 = vst.msk [vmem:[#allocation2] sm:$0xff] %vm19, -inf
    %21 = vst.msk [vmem:[#allocation2 + $0x8] sm:$0xff] %vm19, -inf
    %22 = vst.msk [vmem:[#allocation3] sm:$0xff] %vm19, 0
    %23 = vst.msk [vmem:[#allocation3 + $0x8] sm:$0xff] %vm19, 0
  $region17: #{bestrq_forward.1} parent=0 // pred_fallthru
    _
  %v24 = vld [vmem:[%s0] sm:$0xff]
  %v25 = vld [vmem:[%s0 + $0x8] sm:$0xff]
  %v26 = vpack.c.bf16 %v25, %v24
  %v27 = vld [vmem:[%s1] sm:$0xf]
  %v28 = vld [vmem:[%s1 + $0x4] sm:$0xf]
  %v29 = vld [vmem:[%s1 + $0x8] sm:$0xf]
  %v30 = vld [vmem:[%s1 + $0xc] sm:$0xf]
  %v35 = vunpack.c.l.b16 %v27
  %v36 = vunpack.c.l.b16 %v28
  %v37 = vunpack.c.l.b16 %v29
  %v38 = vunpack.c.l.b16 %v30
  %v39 = vpack.c.b16 %v36, %v35
  %v40 = vpack.c.b16 %v38, %v37
  %vm43 = vcmask 261120
  %v45 = vsel %vm43, %v26, 0
  %47 = vmatprep.subr.bf16.mxu0 0
  %48 = vmatpush1.bf16.msra.mxu0 %v39
  %49 = vmatprep.subr.bf16.mxu0 0
  %50 = vmatpush1.bf16.msra.mxu0 %v40
  %51 = vmatprep.subr.bf16.mxu0 0
  %52 = vmatpush1.bf16.msra.mxu0 0
  %53 = vmatprep.subr.bf16.mxu0 0
  %54 = vmatpush1.bf16.msra.mxu0 0
  %55 = vmatprep.subr.bf16.mxu0 0
  %56 = vmatpush1.bf16.msra.mxu0 0
  %57 = vmatprep.subr.bf16.mxu0 0
  %58 = vmatpush1.bf16.msra.mxu0 0
  %59 = vmatprep.subr.bf16.mxu0 0
  %60 = vmatpush1.bf16.msra.mxu0 0
  %61 = vmatprep.subr.bf16.mxu0 0
  %62 = vmatpush1.bf16.msra.mxu0 0
  %63 = vmatprep.subr.bf16.mxu0 0
  %64 = vmatpush1.bf16.msra.mxu0 0
  %65 = vmatprep.subr.bf16.mxu0 0
  %66 = vmatpush1.bf16.msra.mxu0 0
  %67 = vmatprep.subr.bf16.mxu0 0
  %68 = vmatpush1.bf16.msra.mxu0 0
  %69 = vmatprep.subr.bf16.mxu0 0
  %70 = vmatpush1.bf16.msra.mxu0 0
  %71 = vmatprep.subr.bf16.mxu0 0
  %72 = vmatpush1.bf16.msra.mxu0 0
  %73 = vmatprep.subr.bf16.mxu0 0
  %74 = vmatpush1.bf16.msra.mxu0 0
  %75 = vmatprep.subr.bf16.mxu0 0
  %76 = vmatpush1.bf16.msra.mxu0 0
  %77 = vmatprep.subr.bf16.mxu0 0
  %78 = vmatpush1.bf16.msra.mxu0 0
  %79 = vmatprep.mubr.bf16.mxu0 0
  %80 = vmatmul.mubr.bf16.gmra.mrb[0].mxu0 %v45
  %v81 = vpop.f32.mrb[0].mxu0
  %v82 = vadd.f32 0.0, %v81
  %v83 = vpop.f32.mrb[0].mxu0
  %v84 = vpop.f32.mrb[0].mxu0
  %v85 = vadd.f32 0.0, %v84
  %v86 = vpop.f32.mrb[0].mxu0
  %87 = vdwg.mxu0
  %v88 = vlaneseq
  %v89 = vand.u32 %v88, 127
  %s90 = smul.u32 0, 64
  %v91 = vstv %s90
  %v92 = vadd.s32 %v89, %v91
  %vm93 = vcmask 523264
  %v94 = vsel %vm93, %v82, -inf
  %95 = vmax.xlane.f32.xlu0 %v94
  %v96 = vpop.xlane.xlu0 %95
  %v97 = vsel %vm93, %v85, -inf
  %98 = vmax.xlane.f32.xlu0 %v97
  %v99 = vpop.xlane.xlu0 %98
  %vm100 = vcmp.eq.f32.partialorder %v82, %v96
  %vm101 = vcmp.eq.f32.partialorder %v85, %v99
  %v102 = vsel %vm100, %v92, 2147483647
  %v103 = vsel %vm101, %v92, 2147483647
  %v104 = vsel %vm93, %v102, 2147483647
  %v105 = vand.u32 %v104, 65535
  %v106 = vshra.s32 %v104, 16
  %v107 = vcvt.s32.f32 %v105
  %v108 = vcvt.s32.f32 %v106
  %109 = vmin.xlane.f32.xlu0 %v108
  %v110 = vpop.xlane.xlu0 %109
  %vm111 = vcmp.eq.f32.partialorder %v108, %v110
  %v112 = vsel %vm111, %v107, inf
  %113 = vmin.xlane.f32.xlu0 %v112
  %v114 = vpop.xlane.xlu0 %113
  %v115 = vcvt.f32.s32 %v114
  %v116 = vcvt.f32.s32 %v110
  %v117 = vshll.u32 %v116, 16
  %v118 = vadd.s32 %v117, %v115
  %v119 = vsel %vm93, %v103, 2147483647
  %v120 = vand.u32 %v119, 65535
  %v121 = vshra.s32 %v119, 16
  %v122 = vcvt.s32.f32 %v120
  %v123 = vcvt.s32.f32 %v121
  %124 = vmin.xlane.f32.xlu0 %v123
  %v125 = vpop.xlane.xlu0 %124
  %vm126 = vcmp.eq.f32.partialorder %v123, %v125
  %v127 = vsel %vm126, %v122, inf
  %128 = vmin.xlane.f32.xlu0 %v127
  %v129 = vpop.xlane.xlu0 %128
  %v130 = vcvt.f32.s32 %v129
  %v131 = vcvt.f32.s32 %v125
  %v132 = vshll.u32 %v131, 16
  %v133 = vadd.s32 %v132, %v130
  %v134 = vld [vmem:[#allocation2] sm:$0xff]
  %v135 = vld [vmem:[#allocation2 + $0x8] sm:$0xff]
  %vm136 = vcmp.gt.f32.partialorder %v96, %v134
  %vm137 = vcmp.gt.f32.partialorder %v99, %v135
  %v138 = vld [vmem:[#allocation3] sm:$0xff]
  %v139 = vld [vmem:[#allocation3 + $0x8] sm:$0xff]
  %v140 = vsel %vm136, %v118, %v138
  %v141 = vsel %vm137, %v133, %v139
  %vm142 = vcmask 7168
  %143 = vst.msk [vmem:[#allocation3] sm:$0xff] %vm142, %v140
  %144 = vst.msk [vmem:[#allocation3 + $0x8] sm:$0xff] %vm142, %v141
  %v145 = vld [vmem:[#allocation2] sm:$0xff]
  %v146 = vld [vmem:[#allocation2 + $0x8] sm:$0xff]
  %v147 = vsel %vm136, %v96, %v145
  %v148 = vsel %vm137, %v99, %v146
  %149 = vst.msk [vmem:[#allocation2] sm:$0xff] %vm142, %v147
  %150 = vst.msk [vmem:[#allocation2 + $0x8] sm:$0xff] %vm142, %v148
  // Predicated region
  $region18: #{bestrq_forward.1} parent=0 // pred_check
    %p151 = pneg %p15
  $region19: #{bestrq_forward.1} parent=0 // pred_check_branch
    %153 = sbr.rel (%p151) target = $region21
  $region20: #{bestrq_forward.1} parent=0 // pred_region
    %v154 = vld [vmem:[#allocation3] sm:$0xff]
    %v155 = vld [vmem:[#allocation3 + $0x8] sm:$0xff]
    %v156 = vld [vmem:[%s2] sm:$0xff]
    %v157 = vld [vmem:[%s2 + $0x8] sm:$0xff]
    %v158 = vmul.u32 %v154, %v156
    %v159 = vmul.u32 %v155, %v157
    %160 = vst.msk [vmem:[%s3] sm:$0xff] %vm142, %v158
    %161 = vst.msk [vmem:[%s3 + $0x8] sm:$0xff] %vm142, %v159
  $region21: #{bestrq_forward.1} parent=0 // pred_fallthru
    _
  // Predicated region
  $region22: #{bestrq_forward.1} parent=0 // pred_check
    _
  $region23: #{bestrq_forward.1} parent=0 // pred_check_branch
    %163 = sbr.rel (0) target = $region25
  $region24: #{bestrq_forward.1} parent=0 // pred_region
    _
  $region25: #{bestrq_forward.1} parent=0 // pred_fallthru
    _
  // Predicated region
  $region26: #{bestrq_forward.1} parent=0 // pred_check
    _
  $region27: #{bestrq_forward.1} parent=0 // pred_check_branch
    %165 = sbr.rel (0) target = $region29
  $region28: #{bestrq_forward.1} parent=0 // pred_region
    _
  $region29: #{bestrq_forward.1} parent=0 // pred_fallthru
    _

</llo_original>
